<compile_context>
chip_gen: v5e
topology: v5e:2x2
jax: 0.10.0
libtpu: 0.0.40
codegen_flags: <defaults>
</compile_context>

<pallas_src>
import functools

import jax
import jax.numpy as jnp
from jax.experimental import pallas as pl
from jax.experimental.pallas import tpu as pltpu


# --------------------------------------------------------------------------- #
# Kernel
# --------------------------------------------------------------------------- #
def _feat2graph_kernel(x_ref, wq_ref, wk_ref, bq_ref, bk_ref, adj_ref, kx_ref,
                       *, n_valid):
    # x_ref:   (Bblk, Npad, Fpad)  bf16  -- resident across the q axis
    # wq_ref:  (Fpad, Fpad)        bf16  -- pre-transposed (in, out), 1-buffered
    # wk_ref:  (Fpad, Fpad)        bf16
    # bq_ref:  (1, Fpad)           f32
    # bk_ref:  (1, Fpad)           f32
    # adj_ref: (Bblk, tile_q, Npad) f32
    # kx_ref:  (Bblk, Npad, Fpad)  bf16  VMEM scratch (persists across q steps)
    blk_b, n_pad, f_pad = x_ref.shape
    tile_q = adj_ref.shape[1]
    qi = pl.program_id(1)

    # kx for the whole batch block, computed once per batch block (the q axis
    # is innermost / "arbitrary", so qi == 0 is the first step of each block).
    @pl.when(qi == 0)
    def _():
        x2 = x_ref[...].reshape(blk_b * n_pad, f_pad)
        kx = jnp.dot(x2, wk_ref[...],
                     preferred_element_type=jnp.float32) + bk_ref[...]
        kx_ref[...] = kx.astype(kx_ref.dtype).reshape(blk_b, n_pad, f_pad)

    # qx only for this tile of query rows.
    q0 = pl.multiple_of(qi * tile_q, tile_q)
    xq = x_ref[:, pl.ds(q0, tile_q), :].reshape(blk_b * tile_q, f_pad)
    qx = jnp.dot(xq, wq_ref[...],
                 preferred_element_type=jnp.float32) + bq_ref[...]
    qx = qx.reshape(blk_b, tile_q, f_pad).astype(kx_ref.dtype)

    # Attention-style dot, contracting last dims (no explicit kx transpose).
    dot = jnp.einsum("bqf,bkf->bqk", qx, kx_ref[...],
                     preferred_element_type=jnp.float32)

    # adj = L1-normalize(dot ** 2) along the key dim. Squared entries are
    # >= 0 so the L1 norm is the row sum; eps clamp matches
    # torch.nn.functional.normalize(p=1, eps=1e-12).
    sq = dot * dot
    if n_valid < n_pad:  # static: zero padded key columns before the row sum
        lane = jax.lax.broadcasted_iota(jnp.int32, sq.shape, 2)
        sq = jnp.where(lane < n_valid, sq, 0.0)

    denom = jnp.maximum(jnp.sum(sq, axis=-1, keepdims=True), 1e-12)
    adj_ref[...] = (sq * pl.reciprocal(denom, approx=True)).astype(adj_ref.dtype)


# --------------------------------------------------------------------------- #
# Tiling policy helpers
# --------------------------------------------------------------------------- #
def _round_up(x, m):
    return ((x + m - 1) // m) * m


def _maybe_pad_128(d, max_inflation=2.0):
    """Pad d up to a multiple of 128 only if the inflation is tolerable."""
    dp = _round_up(d, 128)
    return dp if (dp != d and dp <= max_inflation * d) else d


def _vmem_budget_and_limit():
    """Generation-aware per-step VMEM budget and compiler vmem limit."""
    cap = 64 * 1024 * 1024  # conservative fallback (v7x per-TC VMEM)
    try:
        info = pltpu.get_tpu_info()
        cap = int(getattr(info, "vmem_capacity_bytes", cap))
    except Exception:
        pass
    # Floor 12 MiB, cap ~38-48 MiB (leave headroom on v7x's 64 MiB per TC).
    budget = max(12 << 20, min(int(cap * 0.6), 48 << 20))
    limit = int(min(cap, budget + (16 << 20)))
    return budget, limit


def _step_bytes(block_b, tile_q, n_pad, f_pad):
    """Per-grid-step VMEM footprint estimate (counts N^2 intermediates)."""
    in_b, acc_b, mm_b = 2, 4, 2  # bf16 x, f32 accum, bf16 matmul operands
    x_tile = 2 * block_b * n_pad * f_pad * in_b          # double-buffered input
    kx = block_b * n_pad * f_pad * mm_b                  # persistent scratch
    qx = block_b * tile_q * f_pad * (acc_b + mm_b)       # f32 temp + bf16 copy
    nn = 2 * block_b * tile_q * n_pad * acc_b            # dot + squared
    adj = 2 * block_b * tile_q * n_pad * acc_b           # double-buffered output
    return x_tile + kx + qx + nn + adj


# --------------------------------------------------------------------------- #
# Wrapper
# --------------------------------------------------------------------------- #
def feat2graph(x, wq, bq, wk, bk, *, block_b=None, tile_q=None,
               vmem_budget_bytes=None, out_dtype=jnp.float32):
    """x: (B, N, F) f32.  wq/wk: (F, F) nn.Linear (out, in) convention.

    Returns (x, adj) with adj: (B, N, N), matching Feat2Graph.forward.
    """
    B, N, F = x.shape
    budget, vmem_limit = _vmem_budget_and_limit()
    if vmem_budget_bytes is not None:
        budget = int(vmem_budget_bytes)

    # Lane-dense padding (exact: weights/biases/x padded with zeros; padded
    # key columns masked in-kernel; padded rows sliced off afterwards).
    f_pad = _maybe_pad_128(F)
    n_pad = _maybe_pad_128(N)

    weight_bytes = 2 * f_pad * f_pad * 2 + 2 * f_pad * 4  # 1-buffered W's + biases

    if _step_bytes(1, n_pad, n_pad, f_pad) + weight_bytes > budget:
        # Large graph: tile the adj query rows; force 128-aligned key dim.
        n_pad = _round_up(N, 128)
        if block_b is None:
            block_b = 1
        if tile_q is None:
            tile_q, t = 128, 128
            while t <= n_pad:
                if (n_pad % t == 0 and
                        _step_bytes(block_b, t, n_pad, f_pad) + weight_bytes
                        <= budget):
                    tile_q = t
                t += 128
    else:
        if tile_q is None:
            tile_q = n_pad
        if block_b is None:
            # Keep >= min(B, 4) grid steps so the "parallel" batch axis can
            # shard across TensorCores (v7x megacore) and the pipeline stays
            # deep, while block_b grows to fill the VMEM budget.
            min_steps = min(B, 4)
            block_b = 1
            for d in range(1, B + 1):
                if B % d or B // d < min_steps:
                    continue
                if (_step_bytes(d, tile_q, n_pad, f_pad) + weight_bytes
                        <= budget):
                    block_b = d

    assert B % block_b == 0, "block_b must divide B"
    assert n_pad % tile_q == 0, "tile_q must divide padded N"

    # --- prepare (padded, pre-transposed, bf16) operands ------------------- #
    x_in = x.astype(jnp.bfloat16)
    if n_pad != N or f_pad != F:
        x_in = jnp.pad(x_in, ((0, 0), (0, n_pad - N), (0, f_pad - F)))

    def prep_w(w):  # (out, in) -> (in, out), zero-padded, bf16
        wt = w.T
        if f_pad != F:
            wt = jnp.pad(wt, ((0, f_pad - F), (0, f_pad - F)))
        return wt.astype(jnp.bfloat16)

    def prep_b(b):
        if f_pad != F:
            b = jnp.pad(b, (0, f_pad - F))
        return b.reshape(1, f_pad).astype(jnp.float32)

    wqT, wkT = prep_w(wq), prep_w(wk)
    bq2, bk2 = prep_b(bq), prep_b(bk)

    kernel = functools.partial(_feat2graph_kernel, n_valid=N)
    single_buf = dict(pipeline_mode=pl.Buffered(1))  # grid-invariant blocks
    grid = (B // block_b, n_pad // tile_q)

    adj_full = pl.pallas_call(
        kernel,
        out_shape=jax.ShapeDtypeStruct((B, n_pad, n_pad), out_dtype),
        grid_spec=pltpu.PrefetchScalarGridSpec(
            num_scalar_prefetch=0,
            grid=grid,
            in_specs=[
                pl.BlockSpec((block_b, n_pad, f_pad), lambda b, q: (b, 0, 0)),
                pl.BlockSpec((f_pad, f_pad), lambda b, q: (0, 0), **single_buf),
                pl.BlockSpec((f_pad, f_pad), lambda b, q: (0, 0), **single_buf),
                pl.BlockSpec((1, f_pad), lambda b, q: (0, 0), **single_buf),
                pl.BlockSpec((1, f_pad), lambda b, q: (0, 0), **single_buf),
            ],
            out_specs=pl.BlockSpec((block_b, tile_q, n_pad),
                                   lambda b, q: (b, q, 0)),
            scratch_shapes=[pltpu.VMEM((block_b, n_pad, f_pad), jnp.bfloat16)],
        ),
        compiler_params=pltpu.CompilerParams(
            dimension_semantics=("parallel", "arbitrary"),
            vmem_limit_bytes=vmem_limit,
        ),
    )(x_in, wqT, wkT, bq2, bk2)

    adj = adj_full if n_pad == N else adj_full[:, :N, :N]
    return x, adj


# --------------------------------------------------------------------------- #
# Reference + self-test
# --------------------------------------------------------------------------- #
def _reference(x, wq, bq, wk, bk):
    qx = jnp.einsum("bnf,gf->bng", x, wq) + bq
    kx = jnp.einsum("bnf,gf->bng", x, wk) + bk
    dot = jnp.einsum("bnf,bmf->bnm", qx, kx)
    sq = dot ** 2
    denom = jnp.maximum(jnp.sum(sq, axis=-1, keepdims=True), 1e-12)
    return sq / denom


def _make_case(key, B, N, F):
    kx_, kwq, kbq, kwk, kbk = jax.random.split(key, 5)
    x = jax.random.normal(kx_, (B, N, F), jnp.float32)
    bound = 1.0 / float(F) ** 0.5  # nn.Linear-style init U(-1/sqrt(F), 1/sqrt(F))
    wq = jax.random.uniform(kwq, (F, F), jnp.float32, -bound, bound)
    bq = jax.random.uniform(kbq, (F,), jnp.float32, -bound, bound)
    wk = jax.random.uniform(kwk, (F, F), jnp.float32, -bound, bound)
    bk = jax.random.uniform(kbk, (F,), jnp.float32, -bound, bound)
    return x, wq, bq, wk, bk


if __name__ == "__main__":
    key = jax.random.PRNGKey(0)
    k1, k2 = jax.random.split(key)

    # Case 1: module-sized shapes (batch=2, nodes=8, num_feats=32).
    args1 = _make_case(k1, B=2, N=8, F=32)
    x_out, adj = feat2graph(*args1)
    jax.block_until_ready((x_out, adj))
    ref1 = _reference(*args1)
    assert adj.shape == (2, 8, 8)
    # bf16 MXU operands -> tolerance loosened vs pure-f32 reference.
    assert jnp.allclose(adj, ref1, atol=2e-2, rtol=2e-2)
    assert jnp.array_equal(x_out, args1[0])

    # Case 2: exercise the lane-padding + query-row-tiling path at small
    # shapes by forcing a tiny VMEM budget (validates the large-N code path).
    args2 = _make_case(k2, B=2, N=160, F=96)
    x_out2, adj2 = feat2graph(*args2, vmem_budget_bytes=256 * 1024)
    jax.block_until_ready(adj2)
    ref2 = _reference(*args2)
    assert adj2.shape == (2, 160, 160)
    assert jnp.allclose(adj2, ref2, atol=2e-2, rtol=2e-2)
    assert jnp.array_equal(x_out2, args2[0])

    print("KERNEL_OK")
</pallas_src>

<mosaic_0001>
module attributes {stable_mosaic.version = 11 : i64} {
  func.func @_feat2graph_kernel(%arg0: i32, %arg1: i32, %arg2: memref<1x8x32xbf16, #tpu.memory_space<vmem>>, %arg3: memref<32x32xbf16, #tpu.memory_space<vmem>>, %arg4: memref<32x32xbf16, #tpu.memory_space<vmem>>, %arg5: memref<1x32xf32, #tpu.memory_space<vmem>>, %arg6: memref<1x32xf32, #tpu.memory_space<vmem>>, %arg7: memref<1x8x8xf32, #tpu.memory_space<vmem>>, %arg8: memref<1x8x32xbf16, #tpu.memory_space<vmem>>) attributes {dimension_semantics = [#tpu.dimension_semantics<parallel>, #tpu.dimension_semantics<arbitrary>], iteration_bounds = array<i64: 2, 1>, scalar_prefetch = 0 : i64, scratch_operands = 1 : i64, tpu.core_type = #tpu.core_type<tc>, window_params = [{transform_indices = @transform_0, window_bounds = array<i64: 1, 8, 32>}, {pipeline_mode = #tpu.pipeline_mode<synchronous>, transform_indices = @transform_1, window_bounds = array<i64: 32, 32>}, {pipeline_mode = #tpu.pipeline_mode<synchronous>, transform_indices = @transform_2, window_bounds = array<i64: 32, 32>}, {pipeline_mode = #tpu.pipeline_mode<synchronous>, transform_indices = @transform_3, window_bounds = array<i64: 1, 32>}, {pipeline_mode = #tpu.pipeline_mode<synchronous>, transform_indices = @transform_4, window_bounds = array<i64: 1, 32>}, {transform_indices = @transform_5, window_bounds = array<i64: 1, 8, 8>}]} {
    %c0_i32 = arith.constant 0 : i32
    %0 = arith.cmpi eq, %arg1, %c0_i32 : i32
    %1 = arith.extui %0 : i1 to i32
    %c0_i32_0 = arith.constant 0 : i32
    %2 = arith.cmpi ne, %1, %c0_i32_0 : i32
    scf.if %2 {
      %c0_15 = arith.constant 0 : index
      %c0_16 = arith.constant 0 : index
      %c0_17 = arith.constant 0 : index
      %26 = vector.load %arg2[%c0_15, %c0_16, %c0_17] : memref<1x8x32xbf16, #tpu.memory_space<vmem>>, vector<1x8x32xbf16>
      %27 = vector.shape_cast %26 : vector<1x8x32xbf16> to vector<8x32xbf16>
      %c0_18 = arith.constant 0 : index
      %c0_19 = arith.constant 0 : index
      %28 = vector.load %arg4[%c0_18, %c0_19] : memref<32x32xbf16, #tpu.memory_space<vmem>>, vector<32x32xbf16>
      %cst_20 = arith.constant dense<0.000000e+00> : vector<8x32xf32>
      %29 = tpu.matmul %27, %28, %cst_20 {dimension_numbers = #tpu.dot_dimension_numbers<[1], [0], [0], [1], [0, 0, 1, 1], [], []>} : vector<8x32xbf16>, vector<32x32xbf16>, vector<8x32xf32> -> vector<8x32xf32>
      %c0_21 = arith.constant 0 : index
      %c0_22 = arith.constant 0 : index
      %30 = vector.load %arg6[%c0_21, %c0_22] : memref<1x32xf32, #tpu.memory_space<vmem>>, vector<1x32xf32>
      %31 = vector.broadcast %30 : vector<1x32xf32> to vector<8x32xf32>
      %32 = arith.addf %29, %31 : vector<8x32xf32>
      %33 = arith.truncf %32 : vector<8x32xf32> to vector<8x32xbf16>
      %34 = vector.shape_cast %33 : vector<8x32xbf16> to vector<1x8x32xbf16>
      %c0_23 = arith.constant 0 : index
      %c0_24 = arith.constant 0 : index
      %c0_25 = arith.constant 0 : index
      %35 = vector.load %arg8[%c0_23, %c0_24, %c0_25] : memref<1x8x32xbf16, #tpu.memory_space<vmem>>, vector<1x8x32xbf16>
      tpu.vector_store %arg8[%c0_23, %c0_24, %c0_25], %34 {strides = array<i32>} : memref<1x8x32xbf16, #tpu.memory_space<vmem>>, vector<1x8x32xbf16>,
    } else {
    }
    %c8_i32 = arith.constant 8 : i32
    %3 = arith.muli %arg1, %c8_i32 : i32
    %4 = tpu.assume_multiple %3, 8 : i32
    %c0 = arith.constant 0 : index
    %5 = arith.index_cast %4 : i32 to index
    %c0_1 = arith.constant 0 : index
    %6 = vector.load %arg2[%c0, %5, %c0_1] : memref<1x8x32xbf16, #tpu.memory_space<vmem>>, vector<1x8x32xbf16>
    %7 = vector.shape_cast %6 : vector<1x8x32xbf16> to vector<8x32xbf16>
    %c0_2 = arith.constant 0 : index
    %c0_3 = arith.constant 0 : index
    %8 = vector.load %arg3[%c0_2, %c0_3] : memref<32x32xbf16, #tpu.memory_space<vmem>>, vector<32x32xbf16>
    %cst = arith.constant dense<0.000000e+00> : vector<8x32xf32>
    %9 = tpu.matmul %7, %8, %cst {dimension_numbers = #tpu.dot_dimension_numbers<[1], [0], [0], [1], [0, 0, 1, 1], [], []>} : vector<8x32xbf16>, vector<32x32xbf16>, vector<8x32xf32> -> vector<8x32xf32>
    %c0_4 = arith.constant 0 : index
    %c0_5 = arith.constant 0 : index
    %10 = vector.load %arg5[%c0_4, %c0_5] : memref<1x32xf32, #tpu.memory_space<vmem>>, vector<1x32xf32>
    %11 = vector.broadcast %10 : vector<1x32xf32> to vector<8x32xf32>
    %12 = arith.addf %9, %11 : vector<8x32xf32>
    %13 = vector.shape_cast %12 : vector<8x32xf32> to vector<1x8x32xf32>
    %14 = arith.truncf %13 : vector<1x8x32xf32> to vector<1x8x32xbf16>
    %c0_6 = arith.constant 0 : index
    %c0_7 = arith.constant 0 : index
    %c0_8 = arith.constant 0 : index
    %15 = vector.load %arg8[%c0_6, %c0_7, %c0_8] : memref<1x8x32xbf16, #tpu.memory_space<vmem>>, vector<1x8x32xbf16>
    "tpu.trace_start"() <{level = 10 : i32, message = "bqf,bkf->bqk"}> : () -> ()
    %cst_9 = arith.constant dense<0.000000e+00> : vector<1x8x8xf32>
    %16 = tpu.matmul %14, %15, %cst_9 {dimension_numbers = #tpu.dot_dimension_numbers<[2], [2], [1], [1], [0, 0, 0, 1, 1, 1], [0], [0]>} : vector<1x8x32xbf16>, vector<1x8x32xbf16>, vector<1x8x8xf32> -> vector<1x8x8xf32>
    "tpu.trace_stop"() : () -> ()
    %17 = arith.mulf %16, %16 : vector<1x8x8xf32>
    %cst_10 = arith.constant dense<0.000000e+00> : vector<1x8xf32>
    %18 = vector.multi_reduction <add>, %17, %cst_10 [2] : vector<1x8x8xf32> to vector<1x8xf32>
    %19 = vector.shape_cast %18 : vector<1x8xf32> to vector<1x8x1xf32>
    %cst_11 = arith.constant 9.99999996E-13 : f32
    %20 = vector.broadcast %cst_11 : f32 to vector<1x8x1xf32>
    %21 = arith.maximumf %19, %20 : vector<1x8x1xf32>
    %22 = tpu.reciprocal %21 {approx = true} : vector<1x8x1xf32> -> vector<1x8x1xf32>
    %23 = vector.broadcast %22 : vector<1x8x1xf32> to vector<1x8x8xf32>
    %24 = arith.mulf %17, %23 : vector<1x8x8xf32>
    %c0_12 = arith.constant 0 : index
    %c0_13 = arith.constant 0 : index
    %c0_14 = arith.constant 0 : index
    %25 = vector.load %arg7[%c0_12, %c0_13, %c0_14] : memref<1x8x8xf32, #tpu.memory_space<vmem>>, vector<1x8x8xf32>
    tpu.vector_store %arg7[%c0_12, %c0_13, %c0_14], %24 {strides = array<i32>} : memref<1x8x8xf32, #tpu.memory_space<vmem>>, vector<1x8x8xf32>,
    return
  }
  func.func @transform_0(%arg0: i32, %arg1: i32) -> (i32, i32, i32) {
    %c0_i32 = arith.constant 0 : i32
    %c0_i32_0 = arith.constant 0 : i32
    %c0_i32_1 = arith.constant 0 : i32
    return %arg0, %c0_i32, %c0_i32_0 : i32, i32, i32
  }
  func.func @transform_1(%arg0: i32, %arg1: i32) -> (i32, i32) {
    %c0_i32 = arith.constant 0 : i32
    %c0_i32_0 = arith.constant 0 : i32
    %c0_i32_1 = arith.constant 0 : i32
    return %c0_i32, %c0_i32_0 : i32, i32
  }
  func.func @transform_2(%arg0: i32, %arg1: i32) -> (i32, i32) {
    %c0_i32 = arith.constant 0 : i32
    %c0_i32_0 = arith.constant 0 : i32
    %c0_i32_1 = arith.constant 0 : i32
    return %c0_i32, %c0_i32_0 : i32, i32
  }
  func.func @transform_3(%arg0: i32, %arg1: i32) -> (i32, i32) {
    %c0_i32 = arith.constant 0 : i32
    %c0_i32_0 = arith.constant 0 : i32
    %c0_i32_1 = arith.constant 0 : i32
    return %c0_i32, %c0_i32_0 : i32, i32
  }
  func.func @transform_4(%arg0: i32, %arg1: i32) -> (i32, i32) {
    %c0_i32 = arith.constant 0 : i32
    %c0_i32_0 = arith.constant 0 : i32
    %c0_i32_1 = arith.constant 0 : i32
    return %c0_i32, %c0_i32_0 : i32, i32
  }
  func.func @transform_5(%arg0: i32, %arg1: i32) -> (i32, i32, i32) {
    %c0_i32 = arith.constant 0 : i32
    %c0_i32_0 = arith.constant 0 : i32
    return %arg0, %arg1, %c0_i32 : i32, i32, i32
  }
}

</mosaic_0001>

<llo_original>
// kernel: tpu_custom_call.1
$region0: #{tpu_custom_call.1}
  #allocation0 [shape = 'u32[]', space=smem, size = 0x4, offset = 0x4, fixed_abs, tag = 'smem constant byte address 0x4 - core index']
  #allocation1 [shape = 'u32[72,128]{1,0:T(1,128)}', space=vmem, size = 0x9000, scoped, tag = 'internal scratch']
  #allocation2 [shape = 'bf16[1,8,32]{2,1,0:T(8,128)(2,1)}', space=vmem, size = 0x800, scoped, tag = 'scratch operand']
  %s0 = inlined_call_operand.hbm [shape: bf16[2,8,32], index: 0, kind: input, shape index: {}]
  %s1 = inlined_call_operand.hbm [shape: bf16[32,32], index: 1, kind: input, shape index: {}]
  %s2 = inlined_call_operand.hbm [shape: bf16[32,32], index: 2, kind: input, shape index: {}]
  %s3 = inlined_call_operand.vmem [shape: f32[1,32], index: 3, kind: input, shape index: {}]
  %s4 = inlined_call_operand.vmem [shape: f32[1,32], index: 4, kind: input, shape index: {}]
  %s5 = inlined_call_operand.hbm [shape: f32[2,8,8], index: 5, kind: output, shape index: {}]
  %s6 = sld [smem:[#allocation0]]
  $region69: #{tpu_custom_call.1} parent=0
    _
  %s8 = ssub.s32 1, %s6
  %s9 = scalar_select 0, %s8, %s6
  $region1: #{tpu_custom_call.1} parent=0
    #allocation3 [shape = 'u8[4096]{0}', space=vmem, size = 0x1000, scoped, tag = 'input window, operand 0']
    #allocation4 [shape = 's32[2]{0}', space=sflag, size = 0x8, scoped, tag = 'scoped memory for tpu_custom_call.1']
    #allocation5 [shape = 's32[2]{0}', space=sflag, size = 0x8, scoped, tag = 'scoped memory for tpu_custom_call.1']
    #allocation6 [shape = 'u8[8192]{0}', space=vmem, size = 0x2000, scoped, tag = 'input window, operand 1, single buffered']
    #allocation7 [shape = 's32[1]{0}', space=sflag, size = 0x4, scoped, tag = 'scoped memory for tpu_custom_call.1']
    #allocation8 [shape = 'u8[8192]{0}', space=vmem, size = 0x2000, scoped, tag = 'input window, operand 2, single buffered']
    #allocation9 [shape = 'u8[8192]{0}', space=vmem, size = 0x2000, scoped, tag = 'output window, operand 0']
    %10 = vsyncpa [#allocation4], 0
    %s11 = scalar_lea.sflag [#allocation4], 1
    %12 = vsyncpa %s11, 0
    %13 = vsyncpa [#allocation7], 0
    %14 = vsyncpa [#allocation5], 0
    %s15 = scalar_lea.sflag [#allocation5], 1
    %16 = vsyncpa %s15, 0
    loop: start=0, step=1, limit=4
    $region2: #{tpu_custom_call.1} parent=1 // loop_pre_header
      _
    $region3: #{tpu_custom_call.1} parent=1 // loop_header
      %s18 = sphi 0, %s22
      %p19 = scmp.ge.s32.totalorder %s18, 4
      %s25 = sphi 0, %s37
      %s26 = sphi 0, %s33
      %s27 = sphi 0, %s25
      %s28 = sphi 0, %s26
      %s29 = sphi 0, %s27
      %s30 = sphi 0, %s28
      %s40 = sphi 0, %s42
      %s43 = sphi 0, %s40
      %s44 = sphi 0, %s43
      %s60 = sphi 0, %s44
      %s64 = sphi 0, %s64
      %s66 = sphi 0, %s64
      %s67 = sphi 0, %s66
      %s81 = sphi 0, %s67
      %s85 = sphi 0, %s85
      %s87 = sphi 0, %s85
      %s88 = sphi 0, %s87
      %s102 = sphi 0, %s88
      %s106 = sphi 0, %s106
      %s108 = sphi 0, %s106
      %s109 = sphi 0, %s108
      %s123 = sphi 0, %s109
      %s127 = sphi 0, %s127
      %s129 = sphi 0, %s127
      %s130 = sphi 0, %s129
      %s144 = sphi 0, %s130
      %s152 = sphi 0, %s154
      %s155 = sphi 0, %s152
      %s156 = sphi 0, %s155
      %s172 = sphi 0, %s156
    $region4: #{tpu_custom_call.1} parent=1 // loop_header_branch
      %21 = sbr.rel (%p19) target = $region8
    $region5: #{tpu_custom_call.1} parent=1 // loop_body
      %s23 = ssub.s32 %s18, 1
      %s24 = ssub.s32 %s18, 2
      %s31 = sadd.s32 1, %s26
      %p32 = scmp.ge.s32.totalorder %s31, 1
      %s33 = scalar_select %p32, 0, %s31
      %s34 = sadd.s32 1, %s25
      %s35 = scalar_select %p32, %s34, %s25
      %p36 = scmp.ge.s32.totalorder %s35, 2
      %s37 = scalar_select %p36, 0, %s35
      %s38 = ssub.s32 %s25, %s37
      %p39 = scmp.eq.s32.totalorder %s38, 0
      %s41 = sadd.s32 %s40, 1
      %s42 = scalar_select %p39, %s40, %s41
      %p45 = pneg %p39
      %p46 = scmp.eq.s32.totalorder %s18, 1
      %p47 = por %p45, %p46
      %p48 = scmp.ne.s32.totalorder %s40, %s43
      %p49 = scmp.eq.s32.totalorder %s18, 0
      %p50 = por %p48, %p49
      %p51 = scmp.ne.s32.totalorder %s40, %s43
      %p52 = scmp.eq.s32.totalorder %s23, 1
      %p53 = por %p51, %p52
      %p54 = scmp.ne.s32.totalorder %s43, %s44
      %p55 = scmp.eq.s32.totalorder %s23, 0
      %p56 = por %p54, %p55
      %p57 = scmp.ne.s32.totalorder %s43, %s44
      %p58 = scmp.eq.s32.totalorder %s24, 1
      %p59 = por %p57, %p58
      %p61 = scmp.ne.s32.totalorder %s44, %s60
      %p62 = scmp.eq.s32.totalorder %s24, 0
      %p63 = por %p61, %p62
      %s65 = sadd.s32 %s64, 1
      %p68 = scmp.eq.s32.totalorder %s18, 1
      %p69 = scmp.ne.s32.totalorder %s64, %s66
      %p70 = scmp.eq.s32.totalorder %s18, 0
      %p71 = por %p69, %p70
      %p72 = scmp.ne.s32.totalorder %s64, %s66
      %p73 = scmp.eq.s32.totalorder %s23, 1
      %p74 = por %p72, %p73
      %p75 = scmp.ne.s32.totalorder %s66, %s67
      %p76 = scmp.eq.s32.totalorder %s23, 0
      %p77 = por %p75, %p76
      %p78 = scmp.ne.s32.totalorder %s66, %s67
      %p79 = scmp.eq.s32.totalorder %s24, 1
      %p80 = por %p78, %p79
      %p82 = scmp.ne.s32.totalorder %s67, %s81
      %p83 = scmp.eq.s32.totalorder %s24, 0
      %p84 = por %p82, %p83
      %s86 = sadd.s32 %s85, 1
      %p89 = scmp.eq.s32.totalorder %s18, 1
      %p90 = scmp.ne.s32.totalorder %s85, %s87
      %p91 = scmp.eq.s32.totalorder %s18, 0
      %p92 = por %p90, %p91
      %p93 = scmp.ne.s32.totalorder %s85, %s87
      %p94 = scmp.eq.s32.totalorder %s23, 1
      %p95 = por %p93, %p94
      %p96 = scmp.ne.s32.totalorder %s87, %s88
      %p97 = scmp.eq.s32.totalorder %s23, 0
      %p98 = por %p96, %p97
      %p99 = scmp.ne.s32.totalorder %s87, %s88
      %p100 = scmp.eq.s32.totalorder %s24, 1
      %p101 = por %p99, %p100
      %p103 = scmp.ne.s32.totalorder %s88, %s102
      %p104 = scmp.eq.s32.totalorder %s24, 0
      %p105 = por %p103, %p104
      %s107 = sadd.s32 %s106, 1
      %p110 = scmp.eq.s32.totalorder %s18, 1
      %p111 = scmp.ne.s32.totalorder %s106, %s108
      %p112 = scmp.eq.s32.totalorder %s18, 0
      %p113 = por %p111, %p112
      %p114 = scmp.ne.s32.totalorder %s106, %s108
      %p115 = scmp.eq.s32.totalorder %s23, 1
      %p116 = por %p114, %p115
      %p117 = scmp.ne.s32.totalorder %s108, %s109
      %p118 = scmp.eq.s32.totalorder %s23, 0
      %p119 = por %p117, %p118
      %p120 = scmp.ne.s32.totalorder %s108, %s109
      %p121 = scmp.eq.s32.totalorder %s24, 1
      %p122 = por %p120, %p121
      %p124 = scmp.ne.s32.totalorder %s109, %s123
      %p125 = scmp.eq.s32.totalorder %s24, 0
      %p126 = por %p124, %p125
      %s128 = sadd.s32 %s127, 1
      %p131 = scmp.eq.s32.totalorder %s18, 1
      %p132 = scmp.ne.s32.totalorder %s127, %s129
      %p133 = scmp.eq.s32.totalorder %s18, 0
      %p134 = por %p132, %p133
      %p135 = scmp.ne.s32.totalorder %s127, %s129
      %p136 = scmp.eq.s32.totalorder %s23, 1
      %p137 = por %p135, %p136
      %p138 = scmp.ne.s32.totalorder %s129, %s130
      %p139 = scmp.eq.s32.totalorder %s23, 0
      %p140 = por %p138, %p139
      %p141 = scmp.ne.s32.totalorder %s129, %s130
      %p142 = scmp.eq.s32.totalorder %s24, 1
      %p143 = por %p141, %p142
      %p145 = scmp.ne.s32.totalorder %s130, %s144
      %p146 = scmp.eq.s32.totalorder %s24, 0
      %p147 = por %p145, %p146
      %s148 = ssub.s32 %s25, %s37
      %s149 = ssub.s32 %s26, %s33
      %s150 = sor.u32 %s148, %s149
      %p151 = scmp.eq.s32.totalorder %s150, 0
      %s153 = sadd.s32 %s152, 1
      %s154 = scalar_select %p151, %s152, %s153
      %p157 = pneg %p151
      %p158 = scmp.eq.s32.totalorder %s18, 1
      %p159 = por %p157, %p158
      %p160 = scmp.ne.s32.totalorder %s152, %s155
      %p161 = scmp.eq.s32.totalorder %s18, 0
      %p162 = por %p160, %p161
      %p163 = scmp.ne.s32.totalorder %s152, %s155
      %p164 = scmp.eq.s32.totalorder %s23, 1
      %p165 = por %p163, %p164
      %p166 = scmp.ne.s32.totalorder %s155, %s156
      %p167 = scmp.eq.s32.totalorder %s23, 0
      %p168 = por %p166, %p167
      %p169 = scmp.ne.s32.totalorder %s155, %s156
      %p170 = scmp.eq.s32.totalorder %s24, 1
      %p171 = por %p169, %p170
      %p173 = scmp.ne.s32.totalorder %s156, %s172
      %p174 = scmp.eq.s32.totalorder %s24, 0
      %p175 = por %p173, %p174
      %p176 = scmp.le.s32.totalorder 1, %s18
      %p177 = scmp.lt.s32.totalorder %s18, 3
      %p178 = pnand %p176, %p177
      %p179 = pneg %p178
      // Predicated region
      $region9: #{tpu_custom_call.1} parent=5 // pred_check
        _
      $region10: #{tpu_custom_call.1} parent=5 // pred_check_branch
        %181 = sbr.rel (%p178) target = $region12
      $region11: #{tpu_custom_call.1} parent=5 // pred_region
        %s182 = ssub.s32 %s18, 1
        // Predicated region
        $region13: #{tpu_custom_call.1} parent=11 // pred_check
          %p183 = pneg %p77
        $region14: #{tpu_custom_call.1} parent=11 // pred_check_branch
          %185 = sbr.rel (%p183) target = $region16
        $region15: #{tpu_custom_call.1} parent=11 // pred_region
          %187 = vsyncadd [#allocation7], 0
          %s188 = sshll.u32 %s1, 4
          %s189 = int_to_ptr.hbm [resolvable:$true] %s188
          %s190 = sshll.u32 [#allocation6], 4
          %s191 = int_to_ptr.vmem [resolvable:$true] %s190
          %196 = dma.hbm_to_vmem [thread:$0]  %s189, 256, %s191, [#allocation7], 64, 64, 4
        $region16: #{tpu_custom_call.1} parent=11 // pred_fallthru
          _
        // Predicated region
        $region17: #{tpu_custom_call.1} parent=11 // pred_check
          %p197 = pneg %p98
        $region18: #{tpu_custom_call.1} parent=11 // pred_check_branch
          %199 = sbr.rel (%p197) target = $region20
        $region19: #{tpu_custom_call.1} parent=11 // pred_region
          %201 = vsyncadd [#allocation7], 0
          %s202 = sshll.u32 %s2, 4
          %s203 = int_to_ptr.hbm [resolvable:$true] %s202
          %s204 = sshll.u32 [#allocation8], 4
          %s205 = int_to_ptr.vmem [resolvable:$true] %s204
          %210 = dma.hbm_to_vmem [thread:$0]  %s203, 256, %s205, [#allocation7], 64, 64, 4
        $region20: #{tpu_custom_call.1} parent=11 // pred_fallthru
          _
        // Predicated region
        $region21: #{tpu_custom_call.1} parent=11 // pred_check
          %p211 = pneg %p119
        $region22: #{tpu_custom_call.1} parent=11 // pred_check_branch
          %213 = sbr.rel (%p211) target = $region24
        $region23: #{tpu_custom_call.1} parent=11 // pred_region
          _
        $region24: #{tpu_custom_call.1} parent=11 // pred_fallthru
          _
        // Predicated region
        $region25: #{tpu_custom_call.1} parent=11 // pred_check
          %p214 = pneg %p140
        $region26: #{tpu_custom_call.1} parent=11 // pred_check_branch
          %216 = sbr.rel (%p214) target = $region28
        $region27: #{tpu_custom_call.1} parent=11 // pred_region
          _
        $region28: #{tpu_custom_call.1} parent=11 // pred_fallthru
          _
      $region12: #{tpu_custom_call.1} parent=5 // pred_fallthru
        _
      %p217 = scmp.lt.s32.totalorder %s18, 2
      // Predicated region
      $region29: #{tpu_custom_call.1} parent=5 // pred_check
        %p218 = pneg %p217
      $region30: #{tpu_custom_call.1} parent=5 // pred_check_branch
        %220 = sbr.rel (%p218) target = $region32
      $region31: #{tpu_custom_call.1} parent=5 // pred_region
        // Predicated region
        $region33: #{tpu_custom_call.1} parent=31 // pred_check
          %p221 = pneg %p50
        $region34: #{tpu_custom_call.1} parent=31 // pred_check_branch
          %223 = sbr.rel (%p221) target = $region36
        $region35: #{tpu_custom_call.1} parent=31 // pred_region
          %s224 = sand.u32 %s40, 1
          %s225 = scalar_lea.sflag [#allocation4], %s224
          %s226 = sand.u32 %s40, 1
          %s227 = smul.addr %s226, 4
          %s228 = scalar_lea.vmem [#allocation3], %s227
          %230 = vsyncadd %s225, 0
          %s231 = smul.addr %s25, 4
          %s232 = scalar_lea.hbm %s0, %s231
          %s234 = sshll.u32 %s232, 4
          %s235 = int_to_ptr.hbm [resolvable:$true] %s234
          %s236 = sshll.u32 %s228, 4
          %s237 = int_to_ptr.vmem [resolvable:$true] %s236
          %239 = dma.hbm_to_vmem [thread:$0]  %s235, 64, %s237, %s225
        $region36: #{tpu_custom_call.1} parent=31 // pred_fallthru
          _
      $region32: #{tpu_custom_call.1} parent=5 // pred_fallthru
        _
      %p240 = scmp.le.s32.totalorder 1, %s18
      %p241 = scmp.lt.s32.totalorder %s18, 3
      %p242 = pnand %p240, %p241
      %p243 = pneg %p242
      // Predicated region
      $region37: #{tpu_custom_call.1} parent=5 // pred_check
        _
      $region38: #{tpu_custom_call.1} parent=5 // pred_check_branch
        %245 = sbr.rel (%p242) target = $region40
      $region39: #{tpu_custom_call.1} parent=5 // pred_region
        %s246 = ssub.s32 %s18, 1
        %s247 = sand.u32 %s43, 1
        %s248 = scalar_lea.sflag [#allocation4], %s247
        %s249 = sand.u32 %s43, 1
        %s250 = smul.addr %s249, 4
        %s251 = scalar_lea.vmem [#allocation3], %s250
        // Predicated region
        $region41: #{tpu_custom_call.1} parent=39 // pred_check
          %p252 = pneg %p56
        $region42: #{tpu_custom_call.1} parent=39 // pred_check_branch
          %254 = sbr.rel (%p252) target = $region44
        $region43: #{tpu_custom_call.1} parent=39 // pred_region
          %256 = dma.done %s248, 64
        $region44: #{tpu_custom_call.1} parent=39 // pred_fallthru
          _
        // Predicated region
        $region45: #{tpu_custom_call.1} parent=39 // pred_check
          %p257 = pneg %p77
        $region46: #{tpu_custom_call.1} parent=39 // pred_check_branch
          %259 = sbr.rel (%p257) target = $region48
        $region47: #{tpu_custom_call.1} parent=39 // pred_region
          %261 = dma.done [#allocation7], 256
        $region48: #{tpu_custom_call.1} parent=39 // pred_fallthru
          _
        // Predicated region
        $region49: #{tpu_custom_call.1} parent=39 // pred_check
          %p262 = pneg %p98
        $region50: #{tpu_custom_call.1} parent=39 // pred_check_branch
          %264 = sbr.rel (%p262) target = $region52
        $region51: #{tpu_custom_call.1} parent=39 // pred_region
          %266 = dma.done [#allocation7], 256
        $region52: #{tpu_custom_call.1} parent=39 // pred_fallthru
          _
        %s267 = sand.u32 %s43, 1
        %s268 = scalar_lea.sflag [#allocation4], %s267
        %s269 = sand.u32 %s43, 1
        %s270 = smul.addr %s269, 4
        %s271 = scalar_lea.vmem [#allocation3], %s270
        %p272 = pneg %p56
        %p273 = pneg %p53
        %p274 = pneg %p77
        %p275 = pneg %p74
        %p276 = pneg %p98
        %p277 = pneg %p95
        %p278 = pneg %p119
        %p279 = pneg %p116
        %p280 = pneg %p140
        %p281 = pneg %p137
        %p282 = pneg %p168
        %p283 = pneg %p165
        %s284 = sand.u32 %s155, 1
        %s285 = scalar_lea.sflag [#allocation5], %s284
        %s286 = sand.u32 %s155, 1
        %s287 = smul.addr %s286, 8
        %s288 = scalar_lea.vmem [#allocation9], %s287
        %p290 = scmp.eq.s32.totalorder %s28, 0
        // Predicated region
        $region53: #{tpu_custom_call.1} parent=39 // pred_check
          %p291 = pneg %p290
        $region54: #{tpu_custom_call.1} parent=39 // pred_check_branch
          %293 = sbr.rel (%p291) target = $region56
        $region55: #{tpu_custom_call.1} parent=39 // pred_region
          %v294 = vld [vmem:[%s251] sm:$0xf]
          %v295 = vld [vmem:[#allocation8] sm:$0xf]
          %v296 = vld [vmem:[#allocation8 + $0x4] sm:$0xf]
          %v297 = vld [vmem:[#allocation8 + $0x8] sm:$0xf]
          %v298 = vld [vmem:[#allocation8 + $0xc] sm:$0xf]
          %v299 = vld [vmem:[%s4] sm:$0x1]
          %v301 = vperm.slane %v299, 0
          %v307 = vunpack.c.l.b16 %v295
          %v308 = vunpack.c.l.b16 %v296
          %v309 = vunpack.c.l.b16 %v297
          %v310 = vunpack.c.l.b16 %v298
          %v311 = vpack.c.b16 %v308, %v307
          %v312 = vpack.c.b16 %v310, %v309
          %vm315 = vcmask 261120
          %v317 = vsel %vm315, %v294, 0
          %319 = vmatpush.bf16.msra.mxu0 0
          %320 = vmatpush.bf16.msra.mxu0 0
          %321 = vmatpush.bf16.msra.mxu0 0
          %322 = vmatpush.bf16.msra.mxu0 0
          %323 = vmatpush.bf16.msra.mxu0 0
          %324 = vmatpush.bf16.msra.mxu0 0
          %325 = vmatpush.bf16.msra.mxu0 %v312
          %326 = vmatpush.bf16.msra.mxu0 %v311
          %327 = vmatmul.bf16.gmra.mxu0 %v317
          %v328 = vpop.f32.mrf.mxu0
          %v329 = vadd.f32 %v301, %v328
          %v330 = vpop.f32.mrf.mxu0
          %331 = vdwg.mxu0
          %v332 = vpack.c.bf16 %v329, %v329
          %vm333 = vcmask 257024
          %334 = vst.msk [vmem:[#allocation2] sm:$0xf] %vm333, %v332
        $region56: #{tpu_custom_call.1} parent=39 // pred_fallthru
          _
        %s335 = smul.u32 %s28, 8
        %s336 = sshra.s32 %s335, 3
        %s337 = sand.u32 %s335, 7
        %s338 = smul.addr %s336, 4
        %s339 = scalar_lea.vmem %s251, %s338 [#allocation3]
        %v340 = vld [vmem:[%s339] sm:$0xf]
        %v341 = vld [vmem:[#allocation6] sm:$0xf]
        %v342 = vld [vmem:[#allocation6 + $0x4] sm:$0xf]
        %v343 = vld [vmem:[#allocation6 + $0x8] sm:$0xf]
        %v344 = vld [vmem:[#allocation6 + $0xc] sm:$0xf]
        %v345 = vld [vmem:[%s3] sm:$0x1]
        %v347 = vperm.slane %v345, 0
        %v353 = vunpack.c.l.b16 %v341
        %v354 = vunpack.c.l.b16 %v342
        %v355 = vunpack.c.l.b16 %v343
        %v356 = vunpack.c.l.b16 %v344
        %v357 = vpack.c.b16 %v354, %v353
        %v358 = vpack.c.b16 %v356, %v355
        %vm361 = vcmask 261120
        %v363 = vsel %vm361, %v340, 0
        %365 = vmatpush.bf16.msra.mxu0 0
        %366 = vmatpush.bf16.msra.mxu0 0
        %367 = vmatpush.bf16.msra.mxu0 0
        %368 = vmatpush.bf16.msra.mxu0 0
        %369 = vmatpush.bf16.msra.mxu0 0
        %370 = vmatpush.bf16.msra.mxu0 0
        %371 = vmatpush.bf16.msra.mxu0 %v358
        %372 = vmatpush.bf16.msra.mxu0 %v357
        %373 = vmatmul.bf16.gmra.mxu0 %v363
        %v374 = vpop.f32.mrf.mxu0
        %v375 = vadd.f32 %v347, %v374
        %v376 = vpop.f32.mrf.mxu0
        %377 = vdwg.mxu0
        %v378 = vpack.c.bf16 %v375, %v375
        %v379 = vld [vmem:[#allocation2] sm:$0xf]
        %v381 = vsel %vm361, %v378, 0
        %v384 = vsel %vm361, %v379, 0
        %386 = vmatpush.bf16.xpose.msra.mxu0 0
        %387 = vmatpush.bf16.xpose.msra.mxu0 0
        %388 = vmatpush.bf16.xpose.msra.mxu0 0
        %389 = vmatpush.bf16.xpose.msra.mxu0 0
        %390 = vmatpush.bf16.xpose.msra.mxu0 0
        %391 = vmatpush.bf16.xpose.msra.mxu0 0
        %392 = vmatpush.bf16.xpose.msra.mxu0 0
        %393 = vmatpush.bf16.xpose.msra.mxu0 %v384
        %394 = vmatmul.bf16.gmra.mxu0 %v381
        %v395 = vpop.f32.mrf.mxu0
        %v396 = vadd.f32 0.0, %v395
        %v397 = vpop.f32.mrf.mxu0
        %398 = vdwg.mxu0
        %v399 = vmul.f32 %v396, %v396
        %vm400 = vcmask 64512
        %v401 = vsel %vm400, %v399, 0.0
        %402 = vadd.xlane.f32.xlu0 %v401
        %v403 = vpop.xlane.xlu0 %402
        %v404 = vmax.f32 %v403, 1e-12
        %v405 = vrcp.pop %v404
        %v406 = vmul.f32 %v399, %v405
        %407 = vst.msk [vmem:[%s288] sm:$0xff] %vm400, %v406
        %s408 = sand.u32 %s155, 1
        %s409 = scalar_lea.sflag [#allocation5], %s408
        %s410 = sand.u32 %s155, 1
        %s411 = smul.addr %s410, 8
        %s412 = scalar_lea.vmem [#allocation9], %s411
        // Predicated region
        $region57: #{tpu_custom_call.1} parent=39 // pred_check
          %p413 = pneg %p165
        $region58: #{tpu_custom_call.1} parent=39 // pred_check_branch
          %415 = sbr.rel (%p413) target = $region60
        $region59: #{tpu_custom_call.1} parent=39 // pred_region
          %417 = vsyncadd %s409, 0
          %s418 = sadd.s32 %s28, %s27
          %s419 = smul.addr %s418, 8
          %s420 = scalar_lea.hbm %s5, %s419
          %s422 = sshll.u32 %s412, 4
          %s423 = int_to_ptr.vmem [resolvable:$true] %s422
          %s424 = sshll.u32 %s420, 4
          %s425 = int_to_ptr.hbm [resolvable:$true] %s424
          %427 = dma.vmem_to_hbm [thread:$0]  %s423, 128, %s425, %s409
        $region60: #{tpu_custom_call.1} parent=39 // pred_fallthru
          _
      $region40: #{tpu_custom_call.1} parent=5 // pred_fallthru
        _
      %p428 = scmp.le.s32.totalorder 2, %s18
      // Predicated region
      $region61: #{tpu_custom_call.1} parent=5 // pred_check
        %p429 = pneg %p428
      $region62: #{tpu_custom_call.1} parent=5 // pred_check_branch
        %431 = sbr.rel (%p429) target = $region64
      $region63: #{tpu_custom_call.1} parent=5 // pred_region
        %s432 = ssub.s32 %s18, 2
        // Predicated region
        $region65: #{tpu_custom_call.1} parent=63 // pred_check
          %p433 = pneg %p171
        $region66: #{tpu_custom_call.1} parent=63 // pred_check_branch
          %435 = sbr.rel (%p433) target = $region68
        $region67: #{tpu_custom_call.1} parent=63 // pred_region
          %s436 = sand.u32 %s156, 1
          %s437 = scalar_lea.sflag [#allocation5], %s436
          %s438 = sand.u32 %s156, 1
          %s439 = smul.addr %s438, 8
          %s440 = scalar_lea.vmem [#allocation9], %s439
          %442 = dma.done %s437, 128
        $region68: #{tpu_custom_call.1} parent=63 // pred_fallthru
          _
      $region64: #{tpu_custom_call.1} parent=5 // pred_fallthru
        _
    $region6: #{tpu_custom_call.1} parent=1 // loop_footer
      %s22 = sadd.s32 1, %s18
    $region7: #{tpu_custom_call.1} parent=1 // loop_footer_branch
      %17 = sbr.rel target = $region3
    $region8: #{tpu_custom_call.1} parent=1 // loop_exit
      _
    %443 = vsyncpa [#allocation4], 1
    %s444 = scalar_lea.sflag [#allocation4], 1
    %445 = vsyncpa %s444, 1
    %446 = vsyncpa [#allocation7], 1
    %447 = vsyncpa [#allocation5], 1
    %s448 = scalar_lea.sflag [#allocation5], 1
    %449 = vsyncpa %s448, 1

</llo_original>
